<compile_context>
chip_gen: v6e
topology: v6e:2x2x1
jax: 0.10.0
libtpu: 0.0.40
codegen_flags: <defaults>
</compile_context>

<pallas_src>
import jax
import jax.numpy as jnp
from jax.experimental import pallas as pl
from jax.experimental.pallas import tpu as pltpu


def _vmem_limit_bytes() -> int:
    """Generation-aware scoped-VMEM limit: half of physical VMEM
    (-> 64 MiB on v5e/v6e, 32 MiB on v7x); safe 32 MiB fallback."""
    try:
        cap = int(pltpu.get_tpu_info().vmem_capacity_bytes)
    except Exception:
        cap = 64 * 1024 * 1024
    return max(16 * 1024 * 1024, min(cap // 2, 96 * 1024 * 1024))


def _pick_tiling(n: int, c: int, hw_pad: int, itemsize: int, vmem_limit: int):
    """Pick (nb, tile): nb images per block, tile lanes (multiple of 128).

    Targets ~4 MiB per x block (>=85% of HBM roofline per measured streaming
    roofline) while pass-1 VMEM stays well inside `vmem_limit`:
      pass 1: 2x double-buffered (nb, C, tile) input + 2x (C, tile) f32 acc
      pass 2: 2x in + 2x out blocks.
    """
    c_pad = max(8, -(-c // 8) * 8)
    target = min(4 << 20, vmem_limit // 8)
    target = max(target, 128 * c_pad * itemsize)  # never below one 128-lane block

    # Largest multiple-of-128 divisor of hw_pad whose (C, tile) slab fits target.
    tile = 128
    t = 128
    while t <= hw_pad:
        if hw_pad % t == 0 and c_pad * t * itemsize <= target:
            tile = t
        t += 128

    # Block several images when (C, tile) is still small (small C / small HW).
    nb = 1
    for d in range(1, n + 1):
        if n % d == 0 and d * c_pad * tile * itemsize <= target:
            nb = d
    return nb, tile


def _stats_kernel(x_ref, sum_ref, sq_ref, acc_sum, acc_sq):
    # x_ref: (nb, C, TILE).  sum_ref/sq_ref: (C, 1) per-N-block partials
    # (write-once at the last tile).  acc_*: (C, TILE) f32 VMEM scratch.
    t = pl.program_id(1)

    @pl.when(t == 0)
    def _init():
        acc_sum[...] = jnp.zeros_like(acc_sum)
        acc_sq[...] = jnp.zeros_like(acc_sq)

    x = x_ref[...].astype(jnp.float32)            # single cast per tile
    if x.shape[0] == 1:                           # pure VPU adds; no per-tile XLU reduce
        xs = x[0]
        xq = xs * xs
    else:
        xs = jnp.sum(x, axis=0)                   # leading-axis reduce == VPU adds
        xq = jnp.sum(x * x, axis=0)
    acc_sum[...] += xs
    acc_sq[...] += xq

    @pl.when(t == pl.num_programs(1) - 1)
    def _finalize():
        # One cross-lane (XLU) reduce per N-block; tiny write-once outputs.
        sum_ref[...] = jnp.sum(acc_sum[...], axis=-1, keepdims=True)
        sq_ref[...] = jnp.sum(acc_sq[...], axis=-1, keepdims=True)


def _norm_kernel(x_ref, scale_ref, shift_ref, y_ref):
    # x_ref/y_ref: (nb, C, TILE); scale/shift: (C, 1) folded per-channel affine.
    # TODO(synk): on v6e/v7x, bf16 inputs could skip the f32 upcast (pre-cast
    #             scale/shift to bf16); kept f32 for v5e and precision.
    x = x_ref[...].astype(jnp.float32)
    y = x * scale_ref[...][None, :, :] + shift_ref[...][None, :, :]
    y_ref[...] = y.astype(y_ref.dtype)


def batchnorm2d_forward(x, weight, bias, running_mean, running_var,
                        num_batches_tracked, *, eps=1e-5, momentum=0.1):
    """Training-mode BatchNorm2d forward.

    x: (N, C, H, W); weight/bias/running_mean/running_var: (C,).
    Returns (y, new_running_mean, new_running_var, new_num_batches_tracked).
    """
    N, C, H, W = x.shape
    HW = H * W
    L = N * HW                                    # true element count per channel

    x3 = x.reshape(N, C, HW)                      # free reshape, no transpose
    HW_pad = -(-HW // 128) * 128
    if HW_pad != HW:
        # Bounded tail: pad the lane axis with zeros (no effect on sums) so
        # block sizes stay capped regardless of spatial size.
        x3 = jnp.pad(x3, ((0, 0), (0, 0), (0, HW_pad - HW)))

    vmem_limit = _vmem_limit_bytes()
    nb, tile = _pick_tiling(N, C, HW_pad, x.dtype.itemsize, vmem_limit)
    grid = (N // nb, HW_pad // tile)
    g0 = grid[0]

    x_spec = pl.BlockSpec((nb, C, tile), lambda n, t: (n, 0, t))

    # ---- Pass 1: per-(N-block) partial sum / sum-of-squares (streamed). ----
    psum, psq = pl.pallas_call(
        _stats_kernel,
        out_shape=(jax.ShapeDtypeStruct((g0, C, 1), jnp.float32),
                   jax.ShapeDtypeStruct((g0, C, 1), jnp.float32)),
        grid_spec=pltpu.PrefetchScalarGridSpec(
            num_scalar_prefetch=0,
            grid=grid,
            in_specs=[x_spec],
            out_specs=(pl.BlockSpec((None, C, 1), lambda n, t: (n, 0, 0)),
                       pl.BlockSpec((None, C, 1), lambda n, t: (n, 0, 0))),
            scratch_shapes=[pltpu.VMEM((C, tile), jnp.float32),
                            pltpu.VMEM((C, tile), jnp.float32)]),
        compiler_params=pltpu.CompilerParams(
            # N axis "parallel": per-N-block partial outputs make this legal and
            # lets v7x split pass 1 across both TensorCores; t is the reduction.
            dimension_semantics=("parallel", "arbitrary"),
            vmem_limit_bytes=vmem_limit),
    )(x3)

    # ---- Per-channel bookkeeping in plain JAX (G0*C elements; negligible). ----
    csum = jnp.sum(psum[:, :, 0], axis=0)
    csq = jnp.sum(psq[:, :, 0], axis=0)
    inv_l = 1.0 / float(L)
    mean = csum * inv_l
    var = jnp.maximum(csq * inv_l - mean * mean, 0.0)   # biased (unbiased=False)
    inv_std = jax.lax.rsqrt(var + eps)
    scale = weight.astype(jnp.float32) * inv_std        # folded affine
    shift = bias.astype(jnp.float32) - mean * scale

    # ---- Pass 2: y = x * scale + shift (fully parallel over N and HW tiles). ----
    y3 = pl.pallas_call(
        _norm_kernel,
        out_shape=jax.ShapeDtypeStruct((N, C, HW_pad), x.dtype),
        grid_spec=pltpu.PrefetchScalarGridSpec(
            num_scalar_prefetch=0,
            grid=grid,
            in_specs=[x_spec,
                      pl.BlockSpec((C, 1), lambda n, t: (0, 0)),
                      pl.BlockSpec((C, 1), lambda n, t: (0, 0))],
            out_specs=pl.BlockSpec((nb, C, tile), lambda n, t: (n, 0, t))),
        compiler_params=pltpu.CompilerParams(
            dimension_semantics=("parallel", "parallel"),
            vmem_limit_bytes=vmem_limit),
    )(x3, scale.reshape(C, 1), shift.reshape(C, 1))

    if HW_pad != HW:
        y3 = y3[:, :, :HW]
    y = y3.reshape(N, C, H, W)

    # Running-stat blend: spec module uses the biased variance here.
    new_rm = (1.0 - momentum) * running_mean + momentum * mean
    new_rv = (1.0 - momentum) * running_var + momentum * var
    # TODO(synk): num_batches_tracked bump is scalar bookkeeping, kept in plain JAX.
    return y, new_rm, new_rv, num_batches_tracked + 1


def _reference(x, weight, bias, running_mean, running_var, eps, momentum):
    mean = jnp.mean(x, axis=(0, 2, 3))
    var = jnp.var(x, axis=(0, 2, 3))     # biased, matches unbiased=False
    new_rm = (1 - momentum) * running_mean + momentum * mean
    new_rv = (1 - momentum) * running_var + momentum * var
    m = mean.reshape(1, -1, 1, 1)
    v = var.reshape(1, -1, 1, 1)
    y = (x - m) / jnp.sqrt(v + eps)
    y = y * weight.reshape(1, -1, 1, 1) + bias.reshape(1, -1, 1, 1)
    return y, new_rm, new_rv


if __name__ == "__main__":
    N, C, H, W = 2, 4, 16, 16
    eps, momentum = 1e-5, 0.1

    key = jax.random.PRNGKey(0)
    x = jax.random.normal(key, (N, C, H, W), dtype=jnp.float32) * 2.0 + 0.5

    # Deterministic, non-trivial affine params to exercise the folded path.
    weight = 1.0 + 0.1 * jnp.arange(C, dtype=jnp.float32)
    bias = 0.05 * jnp.arange(C, dtype=jnp.float32)
    running_mean = jnp.zeros((C,), dtype=jnp.float32)
    running_var = jnp.ones((C,), dtype=jnp.float32)
    num_batches_tracked = jnp.array(0, dtype=jnp.int32)

    y, nrm, nrv, nbt = batchnorm2d_forward(
        x, weight, bias, running_mean, running_var, num_batches_tracked,
        eps=eps, momentum=momentum)
    jax.block_until_ready((y, nrm, nrv, nbt))

    y_ref, nrm_ref, nrv_ref = _reference(
        x, weight, bias, running_mean, running_var, eps, momentum)

    assert y.shape == (N, C, H, W) and y.dtype == x.dtype
    assert jnp.allclose(y, y_ref, atol=1e-5, rtol=1e-5)
    assert jnp.allclose(nrm, nrm_ref, atol=1e-5, rtol=1e-5)
    assert jnp.allclose(nrv, nrv_ref, atol=1e-5, rtol=1e-5)
    assert int(nbt) == 1

    # Extra check: non-128-divisible spatial size exercises the padded path.
    x2 = jax.random.normal(jax.random.PRNGKey(1), (2, 4, 7, 9), jnp.float32)
    y2, nrm2, nrv2, _ = batchnorm2d_forward(
        x2, weight, bias, running_mean, running_var, num_batches_tracked,
        eps=eps, momentum=momentum)
    y2_ref, nrm2_ref, nrv2_ref = _reference(
        x2, weight, bias, running_mean, running_var, eps, momentum)
    assert jnp.allclose(y2, y2_ref, atol=1e-5, rtol=1e-5)
    assert jnp.allclose(nrm2, nrm2_ref, atol=1e-5, rtol=1e-5)
    assert jnp.allclose(nrv2, nrv2_ref, atol=1e-5, rtol=1e-5)

    print("KERNEL_OK")
</pallas_src>

<mosaic_0001>
module attributes {stable_mosaic.version = 11 : i64} {
  func.func @_stats_kernel(%arg0: i32, %arg1: i32, %arg2: memref<2x4x256xf32, #tpu.memory_space<vmem>>, %arg3: memref<1x4x1xf32, #tpu.memory_space<vmem>>, %arg4: memref<1x4x1xf32, #tpu.memory_space<vmem>>, %arg5: memref<4x256xf32, #tpu.memory_space<vmem>>, %arg6: memref<4x256xf32, #tpu.memory_space<vmem>>) attributes {dimension_semantics = [#tpu.dimension_semantics<parallel>, #tpu.dimension_semantics<arbitrary>], iteration_bounds = array<i64: 1, 1>, scalar_prefetch = 0 : i64, scratch_operands = 2 : i64, tpu.core_type = #tpu.core_type<tc>, window_params = [{transform_indices = @transform_0, window_bounds = array<i64: 2, 4, 256>}, {transform_indices = @transform_1, window_bounds = array<i64: 1, 4, 1>}, {transform_indices = @transform_2, window_bounds = array<i64: 1, 4, 1>}]} {
    %c0_i32 = arith.constant 0 : i32
    %0 = arith.cmpi eq, %arg1, %c0_i32 : i32
    %1 = arith.extui %0 : i1 to i32
    %c0_i32_0 = arith.constant 0 : i32
    %2 = arith.cmpi ne, %1, %c0_i32_0 : i32
    scf.if %2 {
      %cst_14 = arith.constant 0.000000e+00 : f32
      %16 = vector.broadcast %cst_14 : f32 to vector<4x256xf32>
      %c0_15 = arith.constant 0 : index
      %c0_16 = arith.constant 0 : index
      %17 = vector.load %arg5[%c0_15, %c0_16] : memref<4x256xf32, #tpu.memory_space<vmem>>, vector<4x256xf32>
      tpu.vector_store %arg5[%c0_15, %c0_16], %16 {strides = array<i32>} : memref<4x256xf32, #tpu.memory_space<vmem>>, vector<4x256xf32>,
      %cst_17 = arith.constant 0.000000e+00 : f32
      %18 = vector.broadcast %cst_17 : f32 to vector<4x256xf32>
      %c0_18 = arith.constant 0 : index
      %c0_19 = arith.constant 0 : index
      %19 = vector.load %arg6[%c0_18, %c0_19] : memref<4x256xf32, #tpu.memory_space<vmem>>, vector<4x256xf32>
      tpu.vector_store %arg6[%c0_18, %c0_19], %18 {strides = array<i32>} : memref<4x256xf32, #tpu.memory_space<vmem>>, vector<4x256xf32>,
    } else {
    }
    %c0 = arith.constant 0 : index
    %c0_1 = arith.constant 0 : index
    %c0_2 = arith.constant 0 : index
    %3 = vector.load %arg2[%c0, %c0_1, %c0_2] : memref<2x4x256xf32, #tpu.memory_space<vmem>>, vector<2x4x256xf32>
    %cst = arith.constant dense<0.000000e+00> : vector<4x256xf32>
    %4 = vector.multi_reduction <add>, %3, %cst [0] : vector<2x4x256xf32> to vector<4x256xf32>
    %5 = arith.mulf %3, %3 : vector<2x4x256xf32>
    %cst_3 = arith.constant dense<0.000000e+00> : vector<4x256xf32>
    %6 = vector.multi_reduction <add>, %5, %cst_3 [0] : vector<2x4x256xf32> to vector<4x256xf32>
    %c0_4 = arith.constant 0 : index
    %c0_5 = arith.constant 0 : index
    %7 = vector.load %arg5[%c0_4, %c0_5] : memref<4x256xf32, #tpu.memory_space<vmem>>, vector<4x256xf32>
    %8 = arith.addf %7, %4 : vector<4x256xf32>
    %c0_6 = arith.constant 0 : index
    %c0_7 = arith.constant 0 : index
    %9 = vector.load %arg5[%c0_6, %c0_7] : memref<4x256xf32, #tpu.memory_space<vmem>>, vector<4x256xf32>
    tpu.vector_store %arg5[%c0_6, %c0_7], %8 {strides = array<i32>} : memref<4x256xf32, #tpu.memory_space<vmem>>, vector<4x256xf32>,
    %c0_8 = arith.constant 0 : index
    %c0_9 = arith.constant 0 : index
    %10 = vector.load %arg6[%c0_8, %c0_9] : memref<4x256xf32, #tpu.memory_space<vmem>>, vector<4x256xf32>
    %11 = arith.addf %10, %6 : vector<4x256xf32>
    %c0_10 = arith.constant 0 : index
    %c0_11 = arith.constant 0 : index
    %12 = vector.load %arg6[%c0_10, %c0_11] : memref<4x256xf32, #tpu.memory_space<vmem>>, vector<4x256xf32>
    tpu.vector_store %arg6[%c0_10, %c0_11], %11 {strides = array<i32>} : memref<4x256xf32, #tpu.memory_space<vmem>>, vector<4x256xf32>,
    %c0_i32_12 = arith.constant 0 : i32
    %13 = arith.cmpi eq, %arg1, %c0_i32_12 : i32
    %14 = arith.extui %13 : i1 to i32
    %c0_i32_13 = arith.constant 0 : i32
    %15 = arith.cmpi ne, %14, %c0_i32_13 : i32
    scf.if %15 {
      %c0_14 = arith.constant 0 : index
      %c0_15 = arith.constant 0 : index
      %16 = vector.load %arg5[%c0_14, %c0_15] : memref<4x256xf32, #tpu.memory_space<vmem>>, vector<4x256xf32>
      %cst_16 = arith.constant dense<0.000000e+00> : vector<4xf32>
      %17 = vector.multi_reduction <add>, %16, %cst_16 [1] : vector<4x256xf32> to vector<4xf32>
      %18 = vector.shape_cast %17 : vector<4xf32> to vector<4x1xf32>
      %c0_17 = arith.constant 0 : index
      %c0_18 = arith.constant 0 : index
      %c0_19 = arith.constant 0 : index
      %19 = vector.load %arg3[%c0_17, %c0_18, %c0_19] : memref<1x4x1xf32, #tpu.memory_space<vmem>>, vector<1x4x1xf32>
      %20 = vector.shape_cast %19 : vector<1x4x1xf32> to vector<4x1xf32>
      %21 = vector.shape_cast %18 : vector<4x1xf32> to vector<1x4x1xf32>
      tpu.vector_store %arg3[%c0_17, %c0_18, %c0_19], %21 {strides = array<i32>} : memref<1x4x1xf32, #tpu.memory_space<vmem>>, vector<1x4x1xf32>,
      %c0_20 = arith.constant 0 : index
      %c0_21 = arith.constant 0 : index
      %22 = vector.load %arg6[%c0_20, %c0_21] : memref<4x256xf32, #tpu.memory_space<vmem>>, vector<4x256xf32>
      %cst_22 = arith.constant dense<0.000000e+00> : vector<4xf32>
      %23 = vector.multi_reduction <add>, %22, %cst_22 [1] : vector<4x256xf32> to vector<4xf32>
      %24 = vector.shape_cast %23 : vector<4xf32> to vector<4x1xf32>
      %c0_23 = arith.constant 0 : index
      %c0_24 = arith.constant 0 : index
      %c0_25 = arith.constant 0 : index
      %25 = vector.load %arg4[%c0_23, %c0_24, %c0_25] : memref<1x4x1xf32, #tpu.memory_space<vmem>>, vector<1x4x1xf32>
      %26 = vector.shape_cast %25 : vector<1x4x1xf32> to vector<4x1xf32>
      %27 = vector.shape_cast %24 : vector<4x1xf32> to vector<1x4x1xf32>
      tpu.vector_store %arg4[%c0_23, %c0_24, %c0_25], %27 {strides = array<i32>} : memref<1x4x1xf32, #tpu.memory_space<vmem>>, vector<1x4x1xf32>,
    } else {
    }
    return
  }
  func.func @transform_0(%arg0: i32, %arg1: i32) -> (i32, i32, i32) {
    %c0_i32 = arith.constant 0 : i32
    %c0_i32_0 = arith.constant 0 : i32
    return %arg0, %c0_i32, %arg1 : i32, i32, i32
  }
  func.func @transform_1(%arg0: i32, %arg1: i32) -> (i32, i32, i32) {
    %c0_i32 = arith.constant 0 : i32
    %c0_i32_0 = arith.constant 0 : i32
    %c0_i32_1 = arith.constant 0 : i32
    return %arg0, %c0_i32, %c0_i32_0 : i32, i32, i32
  }
  func.func @transform_2(%arg0: i32, %arg1: i32) -> (i32, i32, i32) {
    %c0_i32 = arith.constant 0 : i32
    %c0_i32_0 = arith.constant 0 : i32
    %c0_i32_1 = arith.constant 0 : i32
    return %arg0, %c0_i32, %c0_i32_0 : i32, i32, i32
  }
}

</mosaic_0001>

<llo_original>
// kernel: tpu_custom_call.1
$region0: #{tpu_custom_call.1}
  #allocation0 [shape = 'u32[]', space=smem, size = 0x4, offset = 0x4, fixed_abs, tag = 'smem constant byte address 0x4 - core index']
  #allocation1 [shape = 'u32[144,128]{1,0:T(1,128)}', space=vmem, size = 0x12000, scoped, tag = 'internal scratch']
  #allocation2 [shape = 'f32[4,256]{1,0:T(4,128)}', space=vmem, size = 0x1000, scoped, tag = 'scratch operand']
  #allocation3 [shape = 'f32[4,256]{1,0:T(4,128)}', space=vmem, size = 0x1000, scoped, tag = 'scratch operand']
  %s0 = inlined_call_operand.hbm [shape: f32[2,4,256], index: 0, kind: input, shape index: {}]
  %s1 = inlined_call_operand.vmem [shape: f32[1,4,1], index: 1, kind: output, shape index: {0}]
  %s2 = inlined_call_operand.vmem [shape: f32[1,4,1], index: 2, kind: output, shape index: {1}]
  %3 = xla_tuple %s1, %s2
  %s4 = sld [smem:[#allocation0]]
  $region34: #{tpu_custom_call.1} parent=0
    _
  %s6 = ssub.s32 1, %s4
  %s7 = scalar_select 0, %s6, %s4
  $region1: #{tpu_custom_call.1} parent=0
    #allocation4 [shape = 'u8[8192]{0}', space=vmem, size = 0x2000, scoped, tag = 'input window, operand 0, single buffered']
    #allocation5 [shape = 's32[1]{0}', space=sflag, size = 0x4, scoped, tag = 'scoped memory for tpu_custom_call.1']
    %8 = vsyncpa [#allocation5], 0
    // Predicated region
    $region2: #{tpu_custom_call.1} parent=1 // pred_check
      _
    $region3: #{tpu_custom_call.1} parent=1 // pred_check_branch
      %10 = sbr.rel (0) target = $region5
    $region4: #{tpu_custom_call.1} parent=1 // pred_region
      %s12 = ssub.s32 256, 256
      %13 = vsyncadd [#allocation5], %s12
      %s14 = sshll.u32 [#allocation4], 4
      %s15 = int_to_ptr.vmem [resolvable:$true] %s14
      %20 = dma.hbm_to_vmem [thread:$0]  %s0, 256, %s15, [#allocation5], 128, 128, 8
    $region5: #{tpu_custom_call.1} parent=1 // pred_fallthru
      _
    // Predicated region
    $region6: #{tpu_custom_call.1} parent=1 // pred_check
      _
    $region7: #{tpu_custom_call.1} parent=1 // pred_check_branch
      %22 = sbr.rel (0) target = $region9
    $region8: #{tpu_custom_call.1} parent=1 // pred_region
      %23 = dma.done [#allocation5], 256
    $region9: #{tpu_custom_call.1} parent=1 // pred_fallthru
      _
    %p24 = scmp.eq.s32.totalorder 0, 0
    // Predicated region
    $region10: #{tpu_custom_call.1} parent=1 // pred_check
      %p25 = pneg %p24
    $region11: #{tpu_custom_call.1} parent=1 // pred_check_branch
      %27 = sbr.rel (%p25) target = $region13
    $region12: #{tpu_custom_call.1} parent=1 // pred_region
      %28 = vst [vmem:[#allocation2] sm:$0xff] 0.0
      %29 = vst [vmem:[#allocation3] sm:$0xff] 0.0
    $region13: #{tpu_custom_call.1} parent=1 // pred_fallthru
      _
    %v30 = vld [vmem:[#allocation4] sm:$0xff]
    %v31 = vld [vmem:[#allocation4 + $0x8] sm:$0xff]
    %v34 = vcombine.high %v30, %v30
    %v35 = vcombine.high %v31, %v31
    %vm38 = vcmask 1043456
    %v39 = vsel %vm38, %v30, 0.0
    %v40 = vsel %vm38, %v31, 0.0
    %v41 = vadd.f32 %v39, %v40
    %v42 = vsel %vm38, %v34, 0.0
    %v43 = vsel %vm38, %v35, 0.0
    %v44 = vadd.f32 %v42, %v43
    %v45 = vmul.f32 %v30, %v30
    %v46 = vmul.f32 %v31, %v31
    %v49 = vcombine.high %v45, %v45
    %v50 = vcombine.high %v46, %v46
    %v53 = vsel %vm38, %v45, 0.0
    %v54 = vsel %vm38, %v46, 0.0
    %v55 = vadd.f32 %v53, %v54
    %v56 = vsel %vm38, %v49, 0.0
    %v57 = vsel %vm38, %v50, 0.0
    %v58 = vadd.f32 %v56, %v57
    %v59 = vld [vmem:[#allocation2] sm:$0xff]
    %v62 = vcombine.low %v41, %v44
    %v64 = vadd.f32 %v59, %v62
    %65 = vst [vmem:[#allocation2] sm:$0xff] %v64
    %v66 = vld [vmem:[#allocation3] sm:$0xff]
    %v69 = vcombine.low %v55, %v58
    %v71 = vadd.f32 %v66, %v69
    %72 = vst [vmem:[#allocation3] sm:$0xff] %v71
    // Predicated region
    $region14: #{tpu_custom_call.1} parent=1 // pred_check
      %p73 = pneg %p24
    $region15: #{tpu_custom_call.1} parent=1 // pred_check_branch
      %75 = sbr.rel (%p73) target = $region17
    $region16: #{tpu_custom_call.1} parent=1 // pred_region
      %v76 = vld [vmem:[#allocation2] sm:$0xff]
      %v78 = vcombine.high %v76, %v76
      %v80 = vsel %vm38, %v76, 0.0
      %v81 = vsel %vm38, %v78, 0.0
      %v82 = vadd.f32 %v80, %v81
      %83 = vadd.xlane.f32.xlu0 %v82
      %v84 = vpop.xlane.xlu0 %83
      %vm85 = vcmask 3072
      %86 = vst.msk [vmem:[%s1] sm:$0xf] %vm85, %v84
      %v87 = vld [vmem:[#allocation3] sm:$0xff]
      %v89 = vcombine.high %v87, %v87
      %v91 = vsel %vm38, %v87, 0.0
      %v92 = vsel %vm38, %v89, 0.0
      %v93 = vadd.f32 %v91, %v92
      %94 = vadd.xlane.f32.xlu0 %v93
      %v95 = vpop.xlane.xlu0 %94
      %96 = vst.msk [vmem:[%s2] sm:$0xf] %vm85, %v95
    $region17: #{tpu_custom_call.1} parent=1 // pred_fallthru
      _
    // Predicated region
    $region18: #{tpu_custom_call.1} parent=1 // pred_check
      _
    $region19: #{tpu_custom_call.1} parent=1 // pred_check_branch
      %98 = sbr.rel (0) target = $region21
    $region20: #{tpu_custom_call.1} parent=1 // pred_region
      _
    $region21: #{tpu_custom_call.1} parent=1 // pred_fallthru
      _
    // Predicated region
    $region22: #{tpu_custom_call.1} parent=1 // pred_check
      _
    $region23: #{tpu_custom_call.1} parent=1 // pred_check_branch
      %100 = sbr.rel (0) target = $region25
    $region24: #{tpu_custom_call.1} parent=1 // pred_region
      _
    $region25: #{tpu_custom_call.1} parent=1 // pred_fallthru
      _
    // Predicated region
    $region26: #{tpu_custom_call.1} parent=1 // pred_check
      _
    $region27: #{tpu_custom_call.1} parent=1 // pred_check_branch
      %102 = sbr.rel (0) target = $region29
    $region28: #{tpu_custom_call.1} parent=1 // pred_region
      _
    $region29: #{tpu_custom_call.1} parent=1 // pred_fallthru
      _
    // Predicated region
    $region30: #{tpu_custom_call.1} parent=1 // pred_check
      _
    $region31: #{tpu_custom_call.1} parent=1 // pred_check_branch
      %104 = sbr.rel (0) target = $region33
    $region32: #{tpu_custom_call.1} parent=1 // pred_region
      _
    $region33: #{tpu_custom_call.1} parent=1 // pred_fallthru
      _
    %105 = vsyncpa [#allocation5], 1

</llo_original>
